<compile_context>
chip_gen: v7x
topology: tpu7x:2x2x1
jax: 0.10.0
libtpu: 0.0.40
codegen_flags: <defaults>
</compile_context>

<pallas_src>
import jax
import jax.numpy as jnp
from jax import lax
from jax.experimental import pallas as pl
from jax.experimental.pallas import tpu as pltpu


def _round_up(v, m):
    return (v + m - 1) // m * m


def _conv_bn_relu_kernel(p_ref, w_ref, shift_ref, o_ref):
    # p_ref:     (1, TH, W, K)      bf16  pre-packed 3x3 patches (K = KH*KW*C)
    # w_ref:     (K, O_pad)         bf16  BN-scale-folded weights (im2col layout)
    # shift_ref: (1, O_pad)         f32   folded BN shift (beta - mean*scale), zero-padded
    # o_ref:     (1, TH, W, O_pad)  bf16  output tile (lane-dense last dim)
    _, TH, W, K = p_ref.shape
    O_pad = o_ref.shape[-1]

    patch = p_ref[...].reshape(TH * W, K)                       # (M, K) bf16 (no relayout)
    acc = jnp.dot(patch, w_ref[...],
                  preferred_element_type=jnp.float32)           # (M, O_pad) f32 on MXU

    # Fused BN shift (scale already folded into weights) + ReLU, f32 epilogue.
    y = jnp.maximum(acc + shift_ref[...], 0.0)
    o_ref[...] = y.reshape(1, TH, W, O_pad).astype(o_ref.dtype)


def conv_layer_forward(x_nchw, weight_oihw, bn_gamma, bn_beta, bn_mean, bn_var,
                       eps=1e-5, tile_h=None):
    """ConvLayer forward: Conv2d(k=3, s=1, same pad, no bias) -> BN2d(eval) -> ReLU.

    x_nchw:      (N, C, H, W)  float32
    weight_oihw: (O, C, 3, 3)  float32 (PyTorch OIHW)
    returns:     (N, O, H, W)  float32
    """
    N, C, H, W = x_nchw.shape
    O, _, KH, KW = weight_oihw.shape
    pad = KH // 2
    K9 = KH * KW * C
    O_pad = _round_up(O, 128)                                   # lane-dense output width

    # ---- Tile-size heuristic: M = TH*W large enough to fill the MXU, but keep >=2 H
    # tiles (pipeline depth / megacore) when H allows, and TH a multiple of 8. -----------
    if tile_h is None:
        th = _round_up(max(8, -(-256 // W)), 8)                 # rows for M ~ 256
        th = min(th, max(8, _round_up(H, 8) // 2))              # keep >= 2 H tiles if possible
        tile_h = th
    TH = tile_h
    nH = pl.cdiv(H, TH)
    Hpad = nH * TH

    # ---- Parameter prep (one-time, tiny): fold BN scale into weights -------------------
    scale = bn_gamma / jnp.sqrt(bn_var + eps)                   # (O,)
    shift = bn_beta - bn_mean * scale                           # (O,)
    w_hwio = jnp.transpose(weight_oihw, (2, 3, 1, 0)) * scale   # (KH, KW, C, O)
    w_flat = w_hwio.reshape(K9, O)                              # im2col weight layout
    w_flat = jnp.pad(w_flat, ((0, 0), (0, O_pad - O))).astype(jnp.bfloat16)
    shift_pad = jnp.pad(shift, (0, O_pad - O)).reshape(1, O_pad).astype(jnp.float32)

    # ---- Activation prep: NCHW -> NHWC bf16, spatial pad, pack 3x3 taps along channels --
    x_nhwc = jnp.transpose(x_nchw, (0, 2, 3, 1)).astype(jnp.bfloat16)   # (N, H, W, C)
    x_sp = jnp.pad(x_nhwc, ((0, 0), (pad, pad), (pad, pad), (0, 0)))
    taps = [x_sp[:, kh:kh + H, kw:kw + W, :] for kh in range(KH) for kw in range(KW)]
    patches = jnp.concatenate(taps, axis=-1)                    # (N, H, W, K9) bf16
    if Hpad != H:
        patches = jnp.pad(patches, ((0, 0), (0, Hpad - H), (0, 0), (0, 0)))

    # ---- Explicit per-step VMEM budget (double-buffered in/out, weights, shift) --------
    k_lanes = _round_up(K9, 128)
    step_bytes = (TH * W * k_lanes * 2 * 2          # input tile bf16, 2 buffers
                  + TH * W * O_pad * 2 * 2          # output tile bf16, 2 buffers
                  + _round_up(K9, 8) * O_pad * 2 * 2
                  + 8 * O_pad * 4 * 2)
    vmem_limit = int(min(48 * 2**20, max(16 * 2**20, 4 * step_bytes)))

    flops = 2 * (N * Hpad * W) * K9 * O_pad
    bytes_accessed = int(patches.size * 2 + w_flat.size * 2 + shift_pad.size * 4
                         + N * Hpad * W * O_pad * 2)

    out = pl.pallas_call(
        _conv_bn_relu_kernel,
        out_shape=jax.ShapeDtypeStruct((N, Hpad, W, O_pad), jnp.bfloat16),
        grid_spec=pltpu.PrefetchScalarGridSpec(
            num_scalar_prefetch=0,
            grid=(N, nH),
            in_specs=[
                pl.BlockSpec((1, TH, W, K9), lambda n, h: (n, h, 0, 0)),
                pl.BlockSpec((K9, O_pad), lambda n, h: (0, 0)),     # constant: fetched once
                pl.BlockSpec((1, O_pad), lambda n, h: (0, 0)),      # constant: fetched once
            ],
            out_specs=pl.BlockSpec((1, TH, W, O_pad), lambda n, h: (n, h, 0, 0)),
        ),
        compiler_params=pltpu.CompilerParams(
            dimension_semantics=("parallel", "parallel"),
            vmem_limit_bytes=vmem_limit,
        ),
        cost_estimate=pl.CostEstimate(flops=flops, transcendentals=0,
                                      bytes_accessed=bytes_accessed),
    )(patches, w_flat, shift_pad)

    # Drop padded rows / lanes; return NCHW f32 to match the PyTorch module's interface.
    # (When chaining layers, keep the bf16 NHWC (padded-O) slab instead to avoid these
    # extra activation passes.)
    out = out[:, :H, :, :O]
    return jnp.transpose(out, (0, 3, 1, 2)).astype(jnp.float32)


def _reference_forward(x_nchw, weight_oihw, bn_gamma, bn_beta, bn_mean, bn_var,
                       eps=1e-5):
    # Matched-precision reference: same bf16 rounding of activations / scale-folded
    # weights / output as the kernel, f32 accumulation.
    scale = bn_gamma / jnp.sqrt(bn_var + eps)
    shift = bn_beta - bn_mean * scale
    w_scaled = weight_oihw * scale.reshape(-1, 1, 1, 1)
    xq = x_nchw.astype(jnp.bfloat16).astype(jnp.float32)
    wq = w_scaled.astype(jnp.bfloat16).astype(jnp.float32)
    y = lax.conv_general_dilated(
        xq, wq, window_strides=(1, 1), padding="SAME",
        dimension_numbers=("NCHW", "OIHW", "NCHW"),
        precision=lax.Precision.HIGHEST,
    )
    y = jnp.maximum(y + shift.reshape(1, -1, 1, 1), 0.0)
    return y.astype(jnp.bfloat16).astype(jnp.float32)


if __name__ == "__main__":
    key = jax.random.PRNGKey(0)
    k_x, k_w, k_g, k_b, k_m, k_v = jax.random.split(key, 6)

    # Small shapes: N=2, in_channels=4, out_channels=8, H=W=16, kernel=3.
    N, C, O, H, W, K = 2, 4, 8, 16, 16, 3

    x = jax.random.normal(k_x, (N, C, H, W), dtype=jnp.float32)
    weight = jax.random.normal(k_w, (O, C, K, K), dtype=jnp.float32) * 0.1
    gamma = 1.0 + 0.1 * jax.random.normal(k_g, (O,), dtype=jnp.float32)
    beta = 0.1 * jax.random.normal(k_b, (O,), dtype=jnp.float32)
    running_mean = 0.1 * jax.random.normal(k_m, (O,), dtype=jnp.float32)
    running_var = jnp.abs(1.0 + 0.1 * jax.random.normal(k_v, (O,), dtype=jnp.float32))

    out = conv_layer_forward(x, weight, gamma, beta, running_mean, running_var)
    out = jax.block_until_ready(out)

    ref = _reference_forward(x, weight, gamma, beta, running_mean, running_var)
    assert out.shape == (N, O, H, W)
    assert jnp.allclose(out, ref, atol=1e-2, rtol=1e-2), "mismatch vs JAX reference"

    print("KERNEL_OK")
</pallas_src>

<mosaic_0001>
module attributes {stable_mosaic.version = 11 : i64} {
  func.func @_conv_bn_relu_kernel(%arg0: i32, %arg1: i32, %arg2: memref<1x8x16x36xbf16, #tpu.memory_space<vmem>>, %arg3: memref<36x128xbf16, #tpu.memory_space<vmem>>, %arg4: memref<1x128xf32, #tpu.memory_space<vmem>>, %arg5: memref<1x8x16x128xbf16, #tpu.memory_space<vmem>>) attributes {dimension_semantics = [#tpu.dimension_semantics<parallel>, #tpu.dimension_semantics<parallel>], iteration_bounds = array<i64: 2, 2>, scalar_prefetch = 0 : i64, scratch_operands = 0 : i64, tpu.core_type = #tpu.core_type<tc>, window_params = [{transform_indices = @transform_0, window_bounds = array<i64: 1, 8, 16, 36>}, {pipeline_mode = #tpu.pipeline_mode<synchronous>, transform_indices = @transform_1, window_bounds = array<i64: 36, 128>}, {pipeline_mode = #tpu.pipeline_mode<synchronous>, transform_indices = @transform_2, window_bounds = array<i64: 1, 128>}, {transform_indices = @transform_3, window_bounds = array<i64: 1, 8, 16, 128>}]} {
    %c0 = arith.constant 0 : index
    %c0_0 = arith.constant 0 : index
    %c0_1 = arith.constant 0 : index
    %c0_2 = arith.constant 0 : index
    %0 = vector.load %arg2[%c0, %c0_0, %c0_1, %c0_2] : memref<1x8x16x36xbf16, #tpu.memory_space<vmem>>, vector<1x8x16x36xbf16>
    %1 = vector.shape_cast %0 : vector<1x8x16x36xbf16> to vector<128x36xbf16>
    %c0_3 = arith.constant 0 : index
    %c0_4 = arith.constant 0 : index
    %2 = vector.load %arg3[%c0_3, %c0_4] : memref<36x128xbf16, #tpu.memory_space<vmem>>, vector<36x128xbf16>
    %cst = arith.constant dense<0.000000e+00> : vector<128x128xf32>
    %3 = tpu.matmul %1, %2, %cst {dimension_numbers = #tpu.dot_dimension_numbers<[1], [0], [0], [1], [0, 0, 1, 1], [], []>} : vector<128x36xbf16>, vector<36x128xbf16>, vector<128x128xf32> -> vector<128x128xf32>
    %c0_5 = arith.constant 0 : index
    %c0_6 = arith.constant 0 : index
    %4 = vector.load %arg4[%c0_5, %c0_6] : memref<1x128xf32, #tpu.memory_space<vmem>>, vector<1x128xf32>
    %5 = vector.broadcast %4 : vector<1x128xf32> to vector<128x128xf32>
    %6 = arith.addf %3, %5 : vector<128x128xf32>
    %cst_7 = arith.constant 0.000000e+00 : f32
    %7 = vector.broadcast %cst_7 : f32 to vector<128x128xf32>
    %8 = arith.maximumf %6, %7 : vector<128x128xf32>
    %9 = vector.shape_cast %8 : vector<128x128xf32> to vector<1x8x16x128xf32>
    %10 = arith.truncf %9 : vector<1x8x16x128xf32> to vector<1x8x16x128xbf16>
    %c0_8 = arith.constant 0 : index
    %c0_9 = arith.constant 0 : index
    %c0_10 = arith.constant 0 : index
    %c0_11 = arith.constant 0 : index
    %11 = vector.load %arg5[%c0_8, %c0_9, %c0_10, %c0_11] : memref<1x8x16x128xbf16, #tpu.memory_space<vmem>>, vector<1x8x16x128xbf16>
    tpu.vector_store %arg5[%c0_8, %c0_9, %c0_10, %c0_11], %10 {strides = array<i32>} : memref<1x8x16x128xbf16, #tpu.memory_space<vmem>>, vector<1x8x16x128xbf16>,
    return
  }
  func.func @transform_0(%arg0: i32, %arg1: i32) -> (i32, i32, i32, i32) {
    %c0_i32 = arith.constant 0 : i32
    %c0_i32_0 = arith.constant 0 : i32
    %c0_i32_1 = arith.constant 0 : i32
    return %arg0, %arg1, %c0_i32, %c0_i32_0 : i32, i32, i32, i32
  }
  func.func @transform_1(%arg0: i32, %arg1: i32) -> (i32, i32) {
    %c0_i32 = arith.constant 0 : i32
    %c0_i32_0 = arith.constant 0 : i32
    %c0_i32_1 = arith.constant 0 : i32
    return %c0_i32, %c0_i32_0 : i32, i32
  }
  func.func @transform_2(%arg0: i32, %arg1: i32) -> (i32, i32) {
    %c0_i32 = arith.constant 0 : i32
    %c0_i32_0 = arith.constant 0 : i32
    %c0_i32_1 = arith.constant 0 : i32
    return %c0_i32, %c0_i32_0 : i32, i32
  }
  func.func @transform_3(%arg0: i32, %arg1: i32) -> (i32, i32, i32, i32) {
    %c0_i32 = arith.constant 0 : i32
    %c0_i32_0 = arith.constant 0 : i32
    %c0_i32_1 = arith.constant 0 : i32
    return %arg0, %arg1, %c0_i32, %c0_i32_0 : i32, i32, i32, i32
  }
}

</mosaic_0001>

<llo_original>
// kernel: tpu_custom_call.1
$region0: #{tpu_custom_call.1}
  #allocation0 [shape = 'u32[]', space=smem, size = 0x4, offset = 0x4, fixed_abs, tag = 'smem constant byte address 0x4 - core index']
  #allocation1 [shape = 'u32[144,128]{1,0:T(1,128)}', space=vmem, size = 0x12000, scoped, tag = 'internal scratch']
  %s0 = inlined_call_operand.hbm [shape: bf16[2,16,16,36], index: 0, kind: input, shape index: {}]
  %s1 = inlined_call_operand.hbm [shape: bf16[36,128], index: 1, kind: input, shape index: {}]
  %s2 = inlined_call_operand.vmem [shape: f32[1,128], index: 2, kind: input, shape index: {}]
  %s3 = inlined_call_operand.hbm [shape: bf16[2,16,16,128], index: 3, kind: output, shape index: {}]
  %s4 = sld [smem:[#allocation0]]
  $region53: #{tpu_custom_call.1} parent=0
    _
  %s6 = ssub.s32 1, %s4
  %s7 = scalar_select 0, %s6, %s4
  $region1: #{tpu_custom_call.1} parent=0
    #allocation2 [shape = 'u8[65536]{0}', space=vmem, size = 0x10000, scoped, tag = 'input window, operand 0']
    #allocation3 [shape = 's32[2]{0}', space=sflag, size = 0x8, scoped, tag = 'scoped memory for tpu_custom_call.1']
    #allocation4 [shape = 's32[2]{0}', space=sflag, size = 0x8, scoped, tag = 'scoped memory for tpu_custom_call.1']
    #allocation5 [shape = 'u8[10240]{0}', space=vmem, size = 0x2800, scoped, tag = 'input window, operand 1, single buffered']
    #allocation6 [shape = 's32[1]{0}', space=sflag, size = 0x4, scoped, tag = 'scoped memory for tpu_custom_call.1']
    #allocation7 [shape = 'u8[65536]{0}', space=vmem, size = 0x10000, scoped, tag = 'output window, operand 0']
    %8 = vsyncpa [#allocation3], 0
    %s9 = scalar_lea.sflag [#allocation3], 1
    %10 = vsyncpa %s9, 0
    %11 = vsyncpa [#allocation6], 0
    %12 = vsyncpa [#allocation4], 0
    %s13 = scalar_lea.sflag [#allocation4], 1
    %14 = vsyncpa %s13, 0
    loop: start=0, step=1, limit=6
    $region2: #{tpu_custom_call.1} parent=1 // loop_pre_header
      _
    $region3: #{tpu_custom_call.1} parent=1 // loop_header
      %s16 = sphi 0, %s20
      %p17 = scmp.ge.s32.totalorder %s16, 6
      %s23 = sphi 0, %s35
      %s24 = sphi 0, %s31
      %s25 = sphi 0, %s23
      %s26 = sphi 0, %s24
      %s27 = sphi 0, %s25
      %s28 = sphi 0, %s26
      %s40 = sphi 0, %s42
      %s43 = sphi 0, %s40
      %s44 = sphi 0, %s43
      %s60 = sphi 0, %s44
      %s64 = sphi 0, %s64
      %s66 = sphi 0, %s64
      %s67 = sphi 0, %s66
      %s81 = sphi 0, %s67
      %s85 = sphi 0, %s85
      %s87 = sphi 0, %s85
      %s88 = sphi 0, %s87
      %s102 = sphi 0, %s88
      %s110 = sphi 0, %s112
      %s113 = sphi 0, %s110
      %s114 = sphi 0, %s113
      %s130 = sphi 0, %s114
    $region4: #{tpu_custom_call.1} parent=1 // loop_header_branch
      %19 = sbr.rel (%p17) target = $region8
    $region5: #{tpu_custom_call.1} parent=1 // loop_body
      %s21 = ssub.s32 %s16, 1
      %s22 = ssub.s32 %s16, 2
      %s29 = sadd.s32 1, %s24
      %p30 = scmp.ge.s32.totalorder %s29, 2
      %s31 = scalar_select %p30, 0, %s29
      %s32 = sadd.s32 1, %s23
      %s33 = scalar_select %p30, %s32, %s23
      %p34 = scmp.ge.s32.totalorder %s33, 2
      %s35 = scalar_select %p34, 0, %s33
      %s36 = ssub.s32 %s23, %s35
      %s37 = ssub.s32 %s24, %s31
      %s38 = sor.u32 %s36, %s37
      %p39 = scmp.eq.s32.totalorder %s38, 0
      %s41 = sadd.s32 %s40, 1
      %s42 = scalar_select %p39, %s40, %s41
      %p45 = pneg %p39
      %p46 = scmp.eq.s32.totalorder %s16, 3
      %p47 = por %p45, %p46
      %p48 = scmp.ne.s32.totalorder %s40, %s43
      %p49 = scmp.eq.s32.totalorder %s16, 0
      %p50 = por %p48, %p49
      %p51 = scmp.ne.s32.totalorder %s40, %s43
      %p52 = scmp.eq.s32.totalorder %s21, 3
      %p53 = por %p51, %p52
      %p54 = scmp.ne.s32.totalorder %s43, %s44
      %p55 = scmp.eq.s32.totalorder %s21, 0
      %p56 = por %p54, %p55
      %p57 = scmp.ne.s32.totalorder %s43, %s44
      %p58 = scmp.eq.s32.totalorder %s22, 3
      %p59 = por %p57, %p58
      %p61 = scmp.ne.s32.totalorder %s44, %s60
      %p62 = scmp.eq.s32.totalorder %s22, 0
      %p63 = por %p61, %p62
      %s65 = sadd.s32 %s64, 1
      %p68 = scmp.eq.s32.totalorder %s16, 3
      %p69 = scmp.ne.s32.totalorder %s64, %s66
      %p70 = scmp.eq.s32.totalorder %s16, 0
      %p71 = por %p69, %p70
      %p72 = scmp.ne.s32.totalorder %s64, %s66
      %p73 = scmp.eq.s32.totalorder %s21, 3
      %p74 = por %p72, %p73
      %p75 = scmp.ne.s32.totalorder %s66, %s67
      %p76 = scmp.eq.s32.totalorder %s21, 0
      %p77 = por %p75, %p76
      %p78 = scmp.ne.s32.totalorder %s66, %s67
      %p79 = scmp.eq.s32.totalorder %s22, 3
      %p80 = por %p78, %p79
      %p82 = scmp.ne.s32.totalorder %s67, %s81
      %p83 = scmp.eq.s32.totalorder %s22, 0
      %p84 = por %p82, %p83
      %s86 = sadd.s32 %s85, 1
      %p89 = scmp.eq.s32.totalorder %s16, 3
      %p90 = scmp.ne.s32.totalorder %s85, %s87
      %p91 = scmp.eq.s32.totalorder %s16, 0
      %p92 = por %p90, %p91
      %p93 = scmp.ne.s32.totalorder %s85, %s87
      %p94 = scmp.eq.s32.totalorder %s21, 3
      %p95 = por %p93, %p94
      %p96 = scmp.ne.s32.totalorder %s87, %s88
      %p97 = scmp.eq.s32.totalorder %s21, 0
      %p98 = por %p96, %p97
      %p99 = scmp.ne.s32.totalorder %s87, %s88
      %p100 = scmp.eq.s32.totalorder %s22, 3
      %p101 = por %p99, %p100
      %p103 = scmp.ne.s32.totalorder %s88, %s102
      %p104 = scmp.eq.s32.totalorder %s22, 0
      %p105 = por %p103, %p104
      %s106 = ssub.s32 %s23, %s35
      %s107 = ssub.s32 %s24, %s31
      %s108 = sor.u32 %s106, %s107
      %p109 = scmp.eq.s32.totalorder %s108, 0
      %s111 = sadd.s32 %s110, 1
      %s112 = scalar_select %p109, %s110, %s111
      %p115 = pneg %p109
      %p116 = scmp.eq.s32.totalorder %s16, 3
      %p117 = por %p115, %p116
      %p118 = scmp.ne.s32.totalorder %s110, %s113
      %p119 = scmp.eq.s32.totalorder %s16, 0
      %p120 = por %p118, %p119
      %p121 = scmp.ne.s32.totalorder %s110, %s113
      %p122 = scmp.eq.s32.totalorder %s21, 3
      %p123 = por %p121, %p122
      %p124 = scmp.ne.s32.totalorder %s113, %s114
      %p125 = scmp.eq.s32.totalorder %s21, 0
      %p126 = por %p124, %p125
      %p127 = scmp.ne.s32.totalorder %s113, %s114
      %p128 = scmp.eq.s32.totalorder %s22, 3
      %p129 = por %p127, %p128
      %p131 = scmp.ne.s32.totalorder %s114, %s130
      %p132 = scmp.eq.s32.totalorder %s22, 0
      %p133 = por %p131, %p132
      %p134 = scmp.le.s32.totalorder 1, %s16
      %p135 = scmp.lt.s32.totalorder %s16, 5
      %p136 = pnand %p134, %p135
      %p137 = pneg %p136
      // Predicated region
      $region9: #{tpu_custom_call.1} parent=5 // pred_check
        _
      $region10: #{tpu_custom_call.1} parent=5 // pred_check_branch
        %139 = sbr.rel (%p136) target = $region12
      $region11: #{tpu_custom_call.1} parent=5 // pred_region
        %s140 = ssub.s32 %s16, 1
        // Predicated region
        $region13: #{tpu_custom_call.1} parent=11 // pred_check
          %p141 = pneg %p77
        $region14: #{tpu_custom_call.1} parent=11 // pred_check_branch
          %143 = sbr.rel (%p141) target = $region16
        $region15: #{tpu_custom_call.1} parent=11 // pred_region
          %s145 = ssub.s32 320, 320
          %146 = vsyncadd [#allocation6], %s145
          %s147 = sshll.u32 [#allocation5], 4
          %s148 = int_to_ptr.vmem [resolvable:$true] %s147
          %153 = dma.hbm_to_vmem [thread:$0]  %s1, 320, %s148, [#allocation6], 64, 64, 4
        $region16: #{tpu_custom_call.1} parent=11 // pred_fallthru
          _
        // Predicated region
        $region17: #{tpu_custom_call.1} parent=11 // pred_check
          %p154 = pneg %p98
        $region18: #{tpu_custom_call.1} parent=11 // pred_check_branch
          %156 = sbr.rel (%p154) target = $region20
        $region19: #{tpu_custom_call.1} parent=11 // pred_region
          _
        $region20: #{tpu_custom_call.1} parent=11 // pred_fallthru
          _
      $region12: #{tpu_custom_call.1} parent=5 // pred_fallthru
        _
      %p157 = scmp.lt.s32.totalorder %s16, 4
      // Predicated region
      $region21: #{tpu_custom_call.1} parent=5 // pred_check
        %p158 = pneg %p157
      $region22: #{tpu_custom_call.1} parent=5 // pred_check_branch
        %160 = sbr.rel (%p158) target = $region24
      $region23: #{tpu_custom_call.1} parent=5 // pred_region
        // Predicated region
        $region25: #{tpu_custom_call.1} parent=23 // pred_check
          %p161 = pneg %p50
        $region26: #{tpu_custom_call.1} parent=23 // pred_check_branch
          %163 = sbr.rel (%p161) target = $region28
        $region27: #{tpu_custom_call.1} parent=23 // pred_region
          %s164 = sand.u32 %s40, 1
          %s165 = scalar_lea.sflag [#allocation3], %s164
          %s166 = sand.u32 %s40, 1
          %s167 = smul.addr %s166, 64
          %s168 = scalar_lea.vmem [#allocation2], %s167
          %s169 = smul.u32 8, %s24
          %s171 = ssub.s32 1024, 1024
          %172 = vsyncadd %s165, %s171
          %s173 = smul.addr %s169, 2
          %s174 = smul.addr %s23, 32
          %s175 = sadd.s32 %s173, %s174
          %s176 = smul.addr %s175, 64
          %s177 = scalar_lea.hbm %s0, %s176
          %s178 = sshll.u32 %s168, 4
          %s179 = int_to_ptr.vmem [resolvable:$true] %s178
          %184 = dma.hbm_to_vmem [thread:$0]  %s177, 1024, %s179, %s165, 64, 64, 4
        $region28: #{tpu_custom_call.1} parent=23 // pred_fallthru
          _
      $region24: #{tpu_custom_call.1} parent=5 // pred_fallthru
        _
      %p185 = scmp.le.s32.totalorder 1, %s16
      %p186 = scmp.lt.s32.totalorder %s16, 5
      %p187 = pnand %p185, %p186
      %p188 = pneg %p187
      // Predicated region
      $region29: #{tpu_custom_call.1} parent=5 // pred_check
        _
      $region30: #{tpu_custom_call.1} parent=5 // pred_check_branch
        %190 = sbr.rel (%p187) target = $region32
      $region31: #{tpu_custom_call.1} parent=5 // pred_region
        %s191 = ssub.s32 %s16, 1
        %s192 = sand.u32 %s43, 1
        %s193 = scalar_lea.sflag [#allocation3], %s192
        %s194 = sand.u32 %s43, 1
        %s195 = smul.addr %s194, 64
        %s196 = scalar_lea.vmem [#allocation2], %s195
        // Predicated region
        $region33: #{tpu_custom_call.1} parent=31 // pred_check
          %p197 = pneg %p56
        $region34: #{tpu_custom_call.1} parent=31 // pred_check_branch
          %199 = sbr.rel (%p197) target = $region36
        $region35: #{tpu_custom_call.1} parent=31 // pred_region
          %200 = dma.done %s193, 1024
        $region36: #{tpu_custom_call.1} parent=31 // pred_fallthru
          _
        // Predicated region
        $region37: #{tpu_custom_call.1} parent=31 // pred_check
          %p201 = pneg %p77
        $region38: #{tpu_custom_call.1} parent=31 // pred_check_branch
          %203 = sbr.rel (%p201) target = $region40
        $region39: #{tpu_custom_call.1} parent=31 // pred_region
          %204 = dma.done [#allocation6], 320
        $region40: #{tpu_custom_call.1} parent=31 // pred_fallthru
          _
        %s205 = sand.u32 %s43, 1
        %s206 = scalar_lea.sflag [#allocation3], %s205
        %s207 = sand.u32 %s43, 1
        %s208 = smul.addr %s207, 64
        %s209 = scalar_lea.vmem [#allocation2], %s208
        %p210 = pneg %p56
        %p211 = pneg %p53
        %p212 = pneg %p77
        %p213 = pneg %p74
        %p214 = pneg %p98
        %p215 = pneg %p95
        %p216 = pneg %p126
        %p217 = pneg %p123
        %s218 = sand.u32 %s113, 1
        %s219 = scalar_lea.sflag [#allocation4], %s218
        %s220 = sand.u32 %s113, 1
        %s221 = smul.addr %s220, 64
        %s222 = scalar_lea.vmem [#allocation7], %s221
        %s223 = smul.u32 8, %s26
        %s224 = smul.u32 8, %s26
        %v226 = vld [vmem:[%s196] sm:$0xf]
        %v227 = vld [vmem:[%s196 + $0x4] sm:$0xf]
        %v228 = vld [vmem:[%s196 + $0x8] sm:$0xf]
        %v229 = vld [vmem:[%s196 + $0xc] sm:$0xf]
        %v230 = vld [vmem:[%s196 + $0x10] sm:$0xf]
        %v231 = vld [vmem:[%s196 + $0x14] sm:$0xf]
        %v232 = vld [vmem:[%s196 + $0x18] sm:$0xf]
        %v233 = vld [vmem:[%s196 + $0x1c] sm:$0xf]
        %v234 = vld [vmem:[%s196 + $0x20] sm:$0xf]
        %v235 = vld [vmem:[%s196 + $0x24] sm:$0xf]
        %v236 = vld [vmem:[%s196 + $0x28] sm:$0xf]
        %v237 = vld [vmem:[%s196 + $0x2c] sm:$0xf]
        %v238 = vld [vmem:[%s196 + $0x30] sm:$0xf]
        %v239 = vld [vmem:[%s196 + $0x34] sm:$0xf]
        %v240 = vld [vmem:[%s196 + $0x38] sm:$0xf]
        %v241 = vld [vmem:[%s196 + $0x3c] sm:$0xf]
        %v242 = vld [vmem:[#allocation5] sm:$0xf]
        %v243 = vld [vmem:[#allocation5 + $0x4] sm:$0xf]
        %v244 = vld [vmem:[#allocation5 + $0x8] sm:$0xf]
        %v245 = vld [vmem:[#allocation5 + $0xc] sm:$0xf]
        %v246 = vld [vmem:[#allocation5 + $0x10] sm:$0x3]
        %v247 = vld [vmem:[%s2] sm:$0x1]
        %v249 = vlaneseq
        %v250 = vshrl.u32 %v249, 7
        %v251 = vsub.s32 0, %v250
        %v252 = vrot.slane %v247, %v251
        %v270 = vunpack.c.l.b16 %v226
        %v271 = vunpack.c.l.b16 %v227
        %v272 = vunpack.c.l.b16 %v228
        %v273 = vunpack.c.l.b16 %v229
        %v274 = vunpack.c.l.b16 %v230
        %v275 = vunpack.c.l.b16 %v231
        %v276 = vunpack.c.l.b16 %v232
        %v277 = vunpack.c.l.b16 %v233
        %v278 = vunpack.c.l.b16 %v234
        %v279 = vunpack.c.l.b16 %v235
        %v280 = vunpack.c.l.b16 %v236
        %v281 = vunpack.c.l.b16 %v237
        %v282 = vunpack.c.l.b16 %v238
        %v283 = vunpack.c.l.b16 %v239
        %v284 = vunpack.c.l.b16 %v240
        %v285 = vunpack.c.l.b16 %v241
        %v286 = vpack.c.b16 %v271, %v270
        %v287 = vpack.c.b16 %v273, %v272
        %v288 = vpack.c.b16 %v275, %v274
        %v289 = vpack.c.b16 %v277, %v276
        %v290 = vpack.c.b16 %v279, %v278
        %v291 = vpack.c.b16 %v281, %v280
        %v292 = vpack.c.b16 %v283, %v282
        %v293 = vpack.c.b16 %v285, %v284
        %v299 = vunpack.c.l.b16 %v242
        %v300 = vunpack.c.l.b16 %v243
        %v301 = vunpack.c.l.b16 %v244
        %v302 = vunpack.c.l.b16 %v245
        %v303 = vunpack.c.l.b16 %v246
        %v304 = vpack.c.b16 %v300, %v299
        %v305 = vpack.c.b16 %v302, %v301
        %v306 = vpack.c.b16 %v303, %v303
        %vm309 = vcmask 293888
        %v311 = vsel %vm309, %v286, 0
        %v314 = vsel %vm309, %v287, 0
        %v317 = vsel %vm309, %v288, 0
        %v320 = vsel %vm309, %v289, 0
        %v323 = vsel %vm309, %v290, 0
        %v326 = vsel %vm309, %v291, 0
        %v329 = vsel %vm309, %v292, 0
        %v332 = vsel %vm309, %v293, 0
        %vm334 = vcmask 1041408
        %v336 = vsel %vm334, %v306, 0
        %338 = vmatprep.subr.bf16.mxu0 0
        %339 = vmatpush1.bf16.msra.mxu0 %v304
        %340 = vmatprep.subr.bf16.mxu0 0
        %341 = vmatpush1.bf16.msra.mxu0 %v305
        %342 = vmatprep.subr.bf16.mxu0 0
        %343 = vmatpush1.bf16.msra.mxu0 %v336
        %344 = vmatprep.subr.bf16.mxu0 0
        %345 = vmatpush1.bf16.msra.mxu0 0
        %346 = vmatprep.subr.bf16.mxu0 0
        %347 = vmatpush1.bf16.msra.mxu0 0
        %348 = vmatprep.subr.bf16.mxu0 0
        %349 = vmatpush1.bf16.msra.mxu0 0
        %350 = vmatprep.subr.bf16.mxu0 0
        %351 = vmatpush1.bf16.msra.mxu0 0
        %352 = vmatprep.subr.bf16.mxu0 0
        %353 = vmatpush1.bf16.msra.mxu0 0
        %354 = vmatprep.subr.bf16.mxu0 0
        %355 = vmatpush1.bf16.msra.mxu0 0
        %356 = vmatprep.subr.bf16.mxu0 0
        %357 = vmatpush1.bf16.msra.mxu0 0
        %358 = vmatprep.subr.bf16.mxu0 0
        %359 = vmatpush1.bf16.msra.mxu0 0
        %360 = vmatprep.subr.bf16.mxu0 0
        %361 = vmatpush1.bf16.msra.mxu0 0
        %362 = vmatprep.subr.bf16.mxu0 0
        %363 = vmatpush1.bf16.msra.mxu0 0
        %364 = vmatprep.subr.bf16.mxu0 0
        %365 = vmatpush1.bf16.msra.mxu0 0
        %366 = vmatprep.subr.bf16.mxu0 0
        %367 = vmatpush1.bf16.msra.mxu0 0
        %368 = vmatprep.subr.bf16.mxu0 0
        %369 = vmatpush1.bf16.msra.mxu0 0
        %370 = vmatprep.mubr.bf16.mxu0 0
        %371 = vmatmul.mubr.bf16.gmra.mrb[0].mxu0 %v311
        %v372 = vpop.f32.mrb[0].mxu0
        %v373 = vadd.f32 %v252, %v372
        %v374 = vpop.f32.mrb[0].mxu0
        %v375 = vpop.f32.mrb[0].mxu0
        %v376 = vadd.f32 %v252, %v375
        %v377 = vpop.f32.mrb[0].mxu0
        %378 = vmatprep.mubr.bf16.mxu0 0
        %379 = vmatmul.mubr.bf16.gmra.mrb[0].mxu0 %v314
        %v380 = vpop.f32.mrb[0].mxu0
        %v381 = vadd.f32 %v252, %v380
        %v382 = vpop.f32.mrb[0].mxu0
        %v383 = vpop.f32.mrb[0].mxu0
        %v384 = vadd.f32 %v252, %v383
        %v385 = vpop.f32.mrb[0].mxu0
        %386 = vmatprep.mubr.bf16.mxu0 0
        %387 = vmatmul.mubr.bf16.gmra.mrb[0].mxu0 %v317
        %v388 = vpop.f32.mrb[0].mxu0
        %v389 = vadd.f32 %v252, %v388
        %v390 = vpop.f32.mrb[0].mxu0
        %v391 = vpop.f32.mrb[0].mxu0
        %v392 = vadd.f32 %v252, %v391
        %v393 = vpop.f32.mrb[0].mxu0
        %394 = vmatprep.mubr.bf16.mxu0 0
        %395 = vmatmul.mubr.bf16.gmra.mrb[0].mxu0 %v320
        %v396 = vpop.f32.mrb[0].mxu0
        %v397 = vadd.f32 %v252, %v396
        %v398 = vpop.f32.mrb[0].mxu0
        %v399 = vpop.f32.mrb[0].mxu0
        %v400 = vadd.f32 %v252, %v399
        %v401 = vpop.f32.mrb[0].mxu0
        %402 = vmatprep.mubr.bf16.mxu0 0
        %403 = vmatmul.mubr.bf16.gmra.mrb[0].mxu0 %v323
        %v404 = vpop.f32.mrb[0].mxu0
        %v405 = vadd.f32 %v252, %v404
        %v406 = vpop.f32.mrb[0].mxu0
        %v407 = vpop.f32.mrb[0].mxu0
        %v408 = vadd.f32 %v252, %v407
        %v409 = vpop.f32.mrb[0].mxu0
        %410 = vmatprep.mubr.bf16.mxu0 0
        %411 = vmatmul.mubr.bf16.gmra.mrb[0].mxu0 %v326
        %v412 = vpop.f32.mrb[0].mxu0
        %v413 = vadd.f32 %v252, %v412
        %v414 = vpop.f32.mrb[0].mxu0
        %v415 = vpop.f32.mrb[0].mxu0
        %v416 = vadd.f32 %v252, %v415
        %v417 = vpop.f32.mrb[0].mxu0
        %418 = vmatprep.mubr.bf16.mxu0 0
        %419 = vmatmul.mubr.bf16.gmra.mrb[0].mxu0 %v329
        %v420 = vpop.f32.mrb[0].mxu0
        %v421 = vadd.f32 %v252, %v420
        %v422 = vpop.f32.mrb[0].mxu0
        %v423 = vpop.f32.mrb[0].mxu0
        %v424 = vadd.f32 %v252, %v423
        %v425 = vpop.f32.mrb[0].mxu0
        %426 = vmatprep.mubr.bf16.mxu0 0
        %427 = vmatmul.mubr.bf16.gmra.mrb[0].mxu0 %v332
        %v428 = vpop.f32.mrb[0].mxu0
        %v429 = vadd.f32 %v252, %v428
        %v430 = vpop.f32.mrb[0].mxu0
        %v431 = vpop.f32.mrb[0].mxu0
        %v432 = vadd.f32 %v252, %v431
        %v433 = vpop.f32.mrb[0].mxu0
        %434 = vdwg.mxu0
        %v435 = vmax.f32 %v373, 0.0
        %v436 = vmax.f32 %v376, 0.0
        %v437 = vmax.f32 %v381, 0.0
        %v438 = vmax.f32 %v384, 0.0
        %v439 = vmax.f32 %v389, 0.0
        %v440 = vmax.f32 %v392, 0.0
        %v441 = vmax.f32 %v397, 0.0
        %v442 = vmax.f32 %v400, 0.0
        %v443 = vmax.f32 %v405, 0.0
        %v444 = vmax.f32 %v408, 0.0
        %v445 = vmax.f32 %v413, 0.0
        %v446 = vmax.f32 %v416, 0.0
        %v447 = vmax.f32 %v421, 0.0
        %v448 = vmax.f32 %v424, 0.0
        %v449 = vmax.f32 %v429, 0.0
        %v450 = vmax.f32 %v432, 0.0
        %v451 = vpack.c.bf16 %v436, %v435
        %v452 = vpack.c.bf16 %v438, %v437
        %v453 = vpack.c.bf16 %v440, %v439
        %v454 = vpack.c.bf16 %v442, %v441
        %v455 = vpack.c.bf16 %v444, %v443
        %v456 = vpack.c.bf16 %v446, %v445
        %v457 = vpack.c.bf16 %v448, %v447
        %v458 = vpack.c.bf16 %v450, %v449
        %v467 = vunpack.c.l.b16 %v451
        %v468 = vunpack.c.h.b16 %v451
        %v469 = vunpack.c.l.b16 %v452
        %v470 = vunpack.c.h.b16 %v452
        %v471 = vunpack.c.l.b16 %v453
        %v472 = vunpack.c.h.b16 %v453
        %v473 = vunpack.c.l.b16 %v454
        %v474 = vunpack.c.h.b16 %v454
        %v475 = vunpack.c.l.b16 %v455
        %v476 = vunpack.c.h.b16 %v455
        %v477 = vunpack.c.l.b16 %v456
        %v478 = vunpack.c.h.b16 %v456
        %v479 = vunpack.c.l.b16 %v457
        %v480 = vunpack.c.h.b16 %v457
        %v481 = vunpack.c.l.b16 %v458
        %v482 = vunpack.c.h.b16 %v458
        %v483 = vpack.c.b16 %v467, %v467
        %v484 = vpack.c.b16 %v468, %v468
        %v485 = vpack.c.b16 %v469, %v469
        %v486 = vpack.c.b16 %v470, %v470
        %v487 = vpack.c.b16 %v471, %v471
        %v488 = vpack.c.b16 %v472, %v472
        %v489 = vpack.c.b16 %v473, %v473
        %v490 = vpack.c.b16 %v474, %v474
        %v491 = vpack.c.b16 %v475, %v475
        %v492 = vpack.c.b16 %v476, %v476
        %v493 = vpack.c.b16 %v477, %v477
        %v494 = vpack.c.b16 %v478, %v478
        %v495 = vpack.c.b16 %v479, %v479
        %v496 = vpack.c.b16 %v480, %v480
        %v497 = vpack.c.b16 %v481, %v481
        %v498 = vpack.c.b16 %v482, %v482
        %515 = vst [vmem:[%s222] sm:$0xf] %v483
        %516 = vst [vmem:[%s222 + $0x4] sm:$0xf] %v484
        %517 = vst [vmem:[%s222 + $0x8] sm:$0xf] %v485
        %518 = vst [vmem:[%s222 + $0xc] sm:$0xf] %v486
        %519 = vst [vmem:[%s222 + $0x10] sm:$0xf] %v487
        %520 = vst [vmem:[%s222 + $0x14] sm:$0xf] %v488
        %521 = vst [vmem:[%s222 + $0x18] sm:$0xf] %v489
        %522 = vst [vmem:[%s222 + $0x1c] sm:$0xf] %v490
        %523 = vst [vmem:[%s222 + $0x20] sm:$0xf] %v491
        %524 = vst [vmem:[%s222 + $0x24] sm:$0xf] %v492
        %525 = vst [vmem:[%s222 + $0x28] sm:$0xf] %v493
        %526 = vst [vmem:[%s222 + $0x2c] sm:$0xf] %v494
        %527 = vst [vmem:[%s222 + $0x30] sm:$0xf] %v495
        %528 = vst [vmem:[%s222 + $0x34] sm:$0xf] %v496
        %529 = vst [vmem:[%s222 + $0x38] sm:$0xf] %v497
        %530 = vst [vmem:[%s222 + $0x3c] sm:$0xf] %v498
        %s531 = sand.u32 %s113, 1
        %s532 = scalar_lea.sflag [#allocation4], %s531
        %s533 = sand.u32 %s113, 1
        %s534 = smul.addr %s533, 64
        %s535 = scalar_lea.vmem [#allocation7], %s534
        // Predicated region
        $region41: #{tpu_custom_call.1} parent=31 // pred_check
          %p536 = pneg %p123
        $region42: #{tpu_custom_call.1} parent=31 // pred_check_branch
          %538 = sbr.rel (%p536) target = $region44
        $region43: #{tpu_custom_call.1} parent=31 // pred_region
          %s539 = smul.u32 8, %s26
          %s541 = ssub.s32 1024, 1024
          %542 = vsyncadd %s532, %s541
          %s543 = smul.addr %s539, 2
          %s544 = smul.addr %s25, 32
          %s545 = sadd.s32 %s543, %s544
          %s546 = smul.addr %s545, 64
          %s547 = scalar_lea.hbm %s3, %s546
          %s548 = sshll.u32 %s535, 4
          %s549 = int_to_ptr.vmem [resolvable:$true] %s548
          %554 = dma.vmem_to_hbm [thread:$0]  %s549, 1024, %s547, %s532, 64, 64, 4
        $region44: #{tpu_custom_call.1} parent=31 // pred_fallthru
          _
      $region32: #{tpu_custom_call.1} parent=5 // pred_fallthru
        _
      %p555 = scmp.le.s32.totalorder 2, %s16
      // Predicated region
      $region45: #{tpu_custom_call.1} parent=5 // pred_check
        %p556 = pneg %p555
      $region46: #{tpu_custom_call.1} parent=5 // pred_check_branch
        %558 = sbr.rel (%p556) target = $region48
      $region47: #{tpu_custom_call.1} parent=5 // pred_region
        %s559 = ssub.s32 %s16, 2
        // Predicated region
        $region49: #{tpu_custom_call.1} parent=47 // pred_check
          %p560 = pneg %p129
        $region50: #{tpu_custom_call.1} parent=47 // pred_check_branch
          %562 = sbr.rel (%p560) target = $region52
        $region51: #{tpu_custom_call.1} parent=47 // pred_region
          %s563 = sand.u32 %s114, 1
          %s564 = scalar_lea.sflag [#allocation4], %s563
          %s565 = sand.u32 %s114, 1
          %s566 = smul.addr %s565, 64
          %s567 = scalar_lea.vmem [#allocation7], %s566
          %568 = dma.done %s564, 1024
        $region52: #{tpu_custom_call.1} parent=47 // pred_fallthru
          _
      $region48: #{tpu_custom_call.1} parent=5 // pred_fallthru
        _
    $region6: #{tpu_custom_call.1} parent=1 // loop_footer
      %s20 = sadd.s32 1, %s16
    $region7: #{tpu_custom_call.1} parent=1 // loop_footer_branch
      %15 = sbr.rel target = $region3
    $region8: #{tpu_custom_call.1} parent=1 // loop_exit
      _
    %569 = vsyncpa [#allocation3], 1
    %s570 = scalar_lea.sflag [#allocation3], 1
    %571 = vsyncpa %s570, 1
    %572 = vsyncpa [#allocation6], 1
    %573 = vsyncpa [#allocation4], 1
    %s574 = scalar_lea.sflag [#allocation4], 1
    %575 = vsyncpa %s574, 1

</llo_original>
